<compile_context>
chip_gen: v5e
topology: v5e:2x2
jax: 0.10.0
libtpu: 0.0.40
codegen_flags: <defaults>
</compile_context>

<pallas_src>
import functools

import jax
import jax.numpy as jnp
from jax.experimental import pallas as pl
from jax.experimental.pallas import tpu as pltpu


def _round_up(x, m):
    return (x + m - 1) // m * m


def bitnet_matmul_kernel(x_ref, w_ref, b_ref, alpha_ref, o_ref, acc_ref):
    """One (tm, tn) output tile, accumulated over the K grid axis.

    x_ref:     (tm, tk)  VMEM  activation tile
    w_ref:     (tk, tn)  VMEM  pre-quantized, pre-transposed weight tile
    b_ref:     (1, tn)   VMEM  bias tile
    alpha_ref: (1, 1)    SMEM  scalar alpha
    o_ref:     (tm, tn)  VMEM  output tile
    acc_ref:   (tm, tn)  VMEM  f32 accumulator scratch
    """
    k = pl.program_id(2)

    @pl.when(k == 0)
    def _():
        acc_ref[...] = jnp.zeros_like(acc_ref)

    acc_ref[...] += jnp.dot(
        x_ref[...], w_ref[...], preferred_element_type=jnp.float32
    )

    @pl.when(k == pl.num_programs(2) - 1)
    def _():
        # alpha / bias applied to the small (tm, tn) accumulator, not the (N, K) weight.
        o_ref[...] = (acc_ref[...] * alpha_ref[0, 0] + b_ref[...]).astype(o_ref.dtype)


def bitnet_linear(x, weight_fp, bias, alpha, *, lambda_val=0.0, training=False,
                  tm=256, tn=256, tk=512):
    """Pallas wrapper reproducing BitNetLinear.forward."""
    N, K = weight_fp.shape
    orig_lead = x.shape[:-1]
    x2 = x.reshape(-1, K)
    M = x2.shape[0]
    out_dtype = x.dtype

    # ---- one-shot quantization in the wrapper (global threshold, matches PyTorch) ----
    w = weight_fp.astype(jnp.float32)
    abs_w = jnp.abs(w)
    threshold = abs_w.mean()
    quantized = jnp.sign(w) * (abs_w > threshold).astype(w.dtype)
    if training:
        eff = (1.0 - lambda_val) * w + lambda_val * quantized
    else:
        eff = quantized
    # Pre-transpose to (K, N); alpha is applied to the accumulator inside the kernel.
    # Ternary values are exact in bf16, so feeding bf16 activations keeps the weight exact.
    # TODO(synk): optional int8 weight path for v5e/v6e MXU (not valid on v7x).
    wt = eff.T.astype(x2.dtype)

    if bias is None:
        bias = jnp.zeros((N,), dtype=jnp.float32)
    b2 = bias.reshape(1, N).astype(jnp.float32)
    alpha2 = alpha.reshape(1, 1).astype(jnp.float32)

    # ---- adaptive tile sizes (respect (8, 128) layout) + zero padding ----
    tm = min(tm, _round_up(M, 8))
    tn = min(tn, _round_up(N, 128))
    tk = min(tk, _round_up(K, 128))
    Mp, Np, Kp = _round_up(M, tm), _round_up(N, tn), _round_up(K, tk)

    if Mp != M or Kp != K:
        x2 = jnp.pad(x2, ((0, Mp - M), (0, Kp - K)))
    if Kp != K or Np != N:
        wt = jnp.pad(wt, ((0, Kp - K), (0, Np - N)))
    if Np != N:
        b2 = jnp.pad(b2, ((0, 0), (0, Np - N)))

    grid = (Mp // tm, Np // tn, Kp // tk)

    out = pl.pallas_call(
        bitnet_matmul_kernel,
        out_shape=jax.ShapeDtypeStruct((Mp, Np), out_dtype),
        grid_spec=pltpu.PrefetchScalarGridSpec(
            num_scalar_prefetch=0,
            grid=grid,
            in_specs=[
                pl.BlockSpec((tm, tk), lambda i, j, k: (i, k)),      # x tile
                pl.BlockSpec((tk, tn), lambda i, j, k: (k, j)),      # weight tile (K, N)
                pl.BlockSpec((1, tn), lambda i, j, k: (0, j)),       # bias tile
                pl.BlockSpec((1, 1), lambda i, j, k: (0, 0),
                             memory_space=pltpu.MemorySpace.SMEM),   # alpha scalar
            ],
            out_specs=pl.BlockSpec((tm, tn), lambda i, j, k: (i, j)),
            scratch_shapes=[pltpu.VMEM((tm, tn), jnp.float32)],
        ),
        compiler_params=pltpu.CompilerParams(
            dimension_semantics=("parallel", "parallel", "arbitrary"),
        ),
    )(x2, wt, b2, alpha2)

    out = out[:M, :N]
    return out.reshape(*orig_lead, N)


def bitnet_linear_ref(x, weight_fp, bias, alpha, *, lambda_val=0.0, training=False):
    """Pure-JAX reference mirroring the PyTorch forward."""
    abs_w = jnp.abs(weight_fp)
    threshold = abs_w.mean()
    quantized = jnp.sign(weight_fp) * (abs_w > threshold).astype(weight_fp.dtype)
    if training:
        eff = (1.0 - lambda_val) * weight_fp + lambda_val * quantized
    else:
        eff = quantized
    eff = eff * alpha[0]
    out = x @ eff.T
    if bias is not None:
        out = out + bias
    return out


if __name__ == "__main__":
    in_features = 32
    out_features = 64
    batch, seq = 2, 8   # flattened M = 16

    key = jax.random.PRNGKey(0)
    k_x, k_w = jax.random.split(key)

    # Deterministic parameter init (matches module: weight ~ randn, bias = 0, alpha = 1)
    x = jax.random.normal(k_x, (batch, seq, in_features), dtype=jnp.float32)
    weight_fp = jax.random.normal(k_w, (out_features, in_features), dtype=jnp.float32)
    bias = jnp.zeros((out_features,), dtype=jnp.float32)
    alpha = jnp.ones((1,), dtype=jnp.float32)

    # Eval-mode forward (quantized path).
    out = bitnet_linear(x, weight_fp, bias, alpha, lambda_val=0.0, training=False)
    out = jax.block_until_ready(out)
    ref = bitnet_linear_ref(x, weight_fp, bias, alpha, lambda_val=0.0, training=False)
    assert out.shape == (batch, seq, out_features)
    assert jnp.allclose(out, ref, atol=1e-5, rtol=1e-5), "eval-mode mismatch vs reference"

    # Training path (lambda blend) also supported.
    out_tr = bitnet_linear(x, weight_fp, bias, alpha, lambda_val=0.3, training=True)
    out_tr = jax.block_until_ready(out_tr)
    ref_tr = bitnet_linear_ref(x, weight_fp, bias, alpha, lambda_val=0.3, training=True)
    assert jnp.allclose(out_tr, ref_tr, atol=1e-5, rtol=1e-5), "training-mode mismatch vs reference"

    print("KERNEL_OK")
</pallas_src>

<mosaic_0001>
module attributes {stable_mosaic.version = 11 : i64} {
  func.func @bitnet_matmul_kernel(%arg0: i32, %arg1: i32, %arg2: i32, %arg3: memref<16x128xf32, #tpu.memory_space<vmem>>, %arg4: memref<128x128xf32, #tpu.memory_space<vmem>>, %arg5: memref<1x128xf32, #tpu.memory_space<vmem>>, %arg6: memref<1x1xf32, #tpu.memory_space<smem>>, %arg7: memref<16x128xf32, #tpu.memory_space<vmem>>, %arg8: memref<16x128xf32, #tpu.memory_space<vmem>>) attributes {dimension_semantics = [#tpu.dimension_semantics<parallel>, #tpu.dimension_semantics<parallel>, #tpu.dimension_semantics<arbitrary>], iteration_bounds = array<i64: 1, 1, 1>, scalar_prefetch = 0 : i64, scratch_operands = 1 : i64, tpu.core_type = #tpu.core_type<tc>, window_params = [{transform_indices = @transform_0, window_bounds = array<i64: 16, 128>}, {transform_indices = @transform_1, window_bounds = array<i64: 128, 128>}, {transform_indices = @transform_2, window_bounds = array<i64: 1, 128>}, {transform_indices = @transform_3, window_bounds = array<i64: 1, 1>}, {transform_indices = @transform_4, window_bounds = array<i64: 16, 128>}]} {
    %c0_i32 = arith.constant 0 : i32
    %0 = arith.cmpi eq, %arg2, %c0_i32 : i32
    %1 = arith.extui %0 : i1 to i32
    %c0_i32_0 = arith.constant 0 : i32
    %2 = arith.cmpi ne, %1, %c0_i32_0 : i32
    scf.if %2 {
      %cst_10 = arith.constant 0.000000e+00 : f32
      %12 = vector.broadcast %cst_10 : f32 to vector<16x128xf32>
      %c0_11 = arith.constant 0 : index
      %c0_12 = arith.constant 0 : index
      %13 = vector.load %arg8[%c0_11, %c0_12] : memref<16x128xf32, #tpu.memory_space<vmem>>, vector<16x128xf32>
      tpu.vector_store %arg8[%c0_11, %c0_12], %12 {strides = array<i32>} : memref<16x128xf32, #tpu.memory_space<vmem>>, vector<16x128xf32>,
    } else {
    }
    %c0 = arith.constant 0 : index
    %c0_1 = arith.constant 0 : index
    %3 = vector.load %arg8[%c0, %c0_1] : memref<16x128xf32, #tpu.memory_space<vmem>>, vector<16x128xf32>
    %c0_2 = arith.constant 0 : index
    %c0_3 = arith.constant 0 : index
    %4 = vector.load %arg3[%c0_2, %c0_3] : memref<16x128xf32, #tpu.memory_space<vmem>>, vector<16x128xf32>
    %c0_4 = arith.constant 0 : index
    %c0_5 = arith.constant 0 : index
    %5 = vector.load %arg4[%c0_4, %c0_5] : memref<128x128xf32, #tpu.memory_space<vmem>>, vector<128x128xf32>
    %cst = arith.constant dense<0.000000e+00> : vector<16x128xf32>
    %6 = tpu.matmul %4, %5, %cst {dimension_numbers = #tpu.dot_dimension_numbers<[1], [0], [0], [1], [0, 0, 1, 1], [], []>} : vector<16x128xf32>, vector<128x128xf32>, vector<16x128xf32> -> vector<16x128xf32>
    %7 = arith.addf %3, %6 : vector<16x128xf32>
    %c0_6 = arith.constant 0 : index
    %c0_7 = arith.constant 0 : index
    %8 = vector.load %arg8[%c0_6, %c0_7] : memref<16x128xf32, #tpu.memory_space<vmem>>, vector<16x128xf32>
    tpu.vector_store %arg8[%c0_6, %c0_7], %7 {strides = array<i32>} : memref<16x128xf32, #tpu.memory_space<vmem>>, vector<16x128xf32>,
    %c0_i32_8 = arith.constant 0 : i32
    %9 = arith.cmpi eq, %arg2, %c0_i32_8 : i32
    %10 = arith.extui %9 : i1 to i32
    %c0_i32_9 = arith.constant 0 : i32
    %11 = arith.cmpi ne, %10, %c0_i32_9 : i32
    scf.if %11 {
      %c0_10 = arith.constant 0 : index
      %c0_11 = arith.constant 0 : index
      %12 = vector.load %arg8[%c0_10, %c0_11] : memref<16x128xf32, #tpu.memory_space<vmem>>, vector<16x128xf32>
      %c0_12 = arith.constant 0 : index
      %c0_13 = arith.constant 0 : index
      %13 = memref.load %arg6[%c0_12, %c0_13] : memref<1x1xf32, #tpu.memory_space<smem>>
      %14 = vector.broadcast %13 : f32 to vector<16x128xf32>
      %15 = arith.mulf %12, %14 : vector<16x128xf32>
      %c0_14 = arith.constant 0 : index
      %c0_15 = arith.constant 0 : index
      %16 = vector.load %arg5[%c0_14, %c0_15] : memref<1x128xf32, #tpu.memory_space<vmem>>, vector<1x128xf32>
      %17 = vector.broadcast %16 : vector<1x128xf32> to vector<16x128xf32>
      %18 = arith.addf %15, %17 : vector<16x128xf32>
      %c0_16 = arith.constant 0 : index
      %c0_17 = arith.constant 0 : index
      %19 = vector.load %arg7[%c0_16, %c0_17] : memref<16x128xf32, #tpu.memory_space<vmem>>, vector<16x128xf32>
      tpu.vector_store %arg7[%c0_16, %c0_17], %18 {strides = array<i32>} : memref<16x128xf32, #tpu.memory_space<vmem>>, vector<16x128xf32>,
    } else {
    }
    return
  }
  func.func @transform_0(%arg0: i32, %arg1: i32, %arg2: i32) -> (i32, i32) {
    %c0_i32 = arith.constant 0 : i32
    return %arg0, %arg2 : i32, i32
  }
  func.func @transform_1(%arg0: i32, %arg1: i32, %arg2: i32) -> (i32, i32) {
    %c0_i32 = arith.constant 0 : i32
    return %arg2, %arg1 : i32, i32
  }
  func.func @transform_2(%arg0: i32, %arg1: i32, %arg2: i32) -> (i32, i32) {
    %c0_i32 = arith.constant 0 : i32
    %c0_i32_0 = arith.constant 0 : i32
    return %c0_i32, %arg1 : i32, i32
  }
  func.func @transform_3(%arg0: i32, %arg1: i32, %arg2: i32) -> (i32, i32) {
    %c0_i32 = arith.constant 0 : i32
    %c0_i32_0 = arith.constant 0 : i32
    %c0_i32_1 = arith.constant 0 : i32
    return %c0_i32, %c0_i32_0 : i32, i32
  }
  func.func @transform_4(%arg0: i32, %arg1: i32, %arg2: i32) -> (i32, i32) {
    %c0_i32 = arith.constant 0 : i32
    return %arg0, %arg1 : i32, i32
  }
}

</mosaic_0001>

<llo_original>
// kernel: tpu_custom_call.1
$region0: #{tpu_custom_call.1}
  #allocation0 [shape = 'u32[]', space=smem, size = 0x4, offset = 0x4, fixed_abs, tag = 'smem constant byte address 0x4 - core index']
  #allocation1 [shape = 'u32[72,128]{1,0:T(1,128)}', space=vmem, size = 0x9000, scoped, tag = 'internal scratch']
  #allocation2 [shape = 'f32[16,128]{1,0:T(8,128)}', space=vmem, size = 0x2000, scoped, tag = 'scratch operand']
  #allocation3 [shape = 'f32[1,1]{1,0:T(1,128)S(6)}', space=smem, size = 0x200, scoped, tag = 'scoped memory for tpu_custom_call.1']
  %s0 = inlined_call_operand.hbm [shape: f32[16,128], index: 0, kind: input, shape index: {}]
  %s1 = inlined_call_operand.hbm [shape: f32[128,128], index: 1, kind: input, shape index: {}]
  %s2 = inlined_call_operand.vmem [shape: f32[1,128], index: 2, kind: input, shape index: {}]
  %s3 = inlined_call_operand.<no memory space> [shape: f32[1,1], index: 3, kind: input, shape index: {}]
  %s4 = inlined_call_operand.hbm [shape: f32[16,128], index: 4, kind: output, shape index: {}]
  %s5 = sld [smem:[#allocation0]]
  $region42: #{tpu_custom_call.1} parent=0
    _
  %s7 = ssub.s32 1, %s5
  %s8 = scalar_select 0, %s7, %s5
  %9 = sst [smem:[#allocation3]] %s3
  $region1: #{tpu_custom_call.1} parent=0
    #allocation4 [shape = 'u8[8192]{0}', space=vmem, size = 0x2000, scoped, tag = 'input window, operand 0, single buffered']
    #allocation5 [shape = 's32[1]{0}', space=sflag, size = 0x4, scoped, tag = 'scoped memory for tpu_custom_call.1']
    #allocation6 [shape = 's32[1]{0}', space=sflag, size = 0x4, scoped, tag = 'scoped memory for tpu_custom_call.1']
    #allocation7 [shape = 'u8[65536]{0}', space=vmem, size = 0x10000, scoped, tag = 'input window, operand 1, single buffered']
    #allocation8 [shape = 's32[1]{0}', space=sflag, size = 0x4, scoped, tag = 'scoped memory for tpu_custom_call.1']
    #allocation9 [shape = 'u8[8192]{0}', space=vmem, size = 0x2000, scoped, tag = 'output window, operand 0, single buffered']
    %10 = vsyncpa [#allocation5], 0
    %11 = vsyncpa [#allocation8], 0
    %12 = vsyncpa [#allocation6], 0
    // Predicated region
    $region2: #{tpu_custom_call.1} parent=1 // pred_check
      _
    $region3: #{tpu_custom_call.1} parent=1 // pred_check_branch
      %14 = sbr.rel (0) target = $region5
    $region4: #{tpu_custom_call.1} parent=1 // pred_region
      %16 = vsyncadd [#allocation5], 0
      %s17 = sshll.u32 %s0, 4
      %s18 = int_to_ptr.hbm [resolvable:$true] %s17
      %s19 = sshll.u32 [#allocation4], 4
      %s20 = int_to_ptr.vmem [resolvable:$true] %s19
      %25 = dma.hbm_to_vmem [thread:$0]  %s18, 256, %s20, [#allocation5], 128, 128, 8
    $region5: #{tpu_custom_call.1} parent=1 // pred_fallthru
      _
    // Predicated region
    $region6: #{tpu_custom_call.1} parent=1 // pred_check
      _
    $region7: #{tpu_custom_call.1} parent=1 // pred_check_branch
      %27 = sbr.rel (0) target = $region9
    $region8: #{tpu_custom_call.1} parent=1 // pred_region
      %29 = vsyncadd [#allocation8], 0
      %s30 = sshll.u32 %s1, 4
      %s31 = int_to_ptr.hbm [resolvable:$true] %s30
      %s32 = sshll.u32 [#allocation7], 4
      %s33 = int_to_ptr.vmem [resolvable:$true] %s32
      %38 = dma.hbm_to_vmem [thread:$0]  %s31, 2048, %s33, [#allocation8], 128, 128, 8
    $region9: #{tpu_custom_call.1} parent=1 // pred_fallthru
      _
    // Predicated region
    $region10: #{tpu_custom_call.1} parent=1 // pred_check
      _
    $region11: #{tpu_custom_call.1} parent=1 // pred_check_branch
      %40 = sbr.rel (0) target = $region13
    $region12: #{tpu_custom_call.1} parent=1 // pred_region
      _
    $region13: #{tpu_custom_call.1} parent=1 // pred_fallthru
      _
    // Predicated region
    $region14: #{tpu_custom_call.1} parent=1 // pred_check
      _
    $region15: #{tpu_custom_call.1} parent=1 // pred_check_branch
      %42 = sbr.rel (0) target = $region17
    $region16: #{tpu_custom_call.1} parent=1 // pred_region
      _
    $region17: #{tpu_custom_call.1} parent=1 // pred_fallthru
      _
    // Predicated region
    $region18: #{tpu_custom_call.1} parent=1 // pred_check
      _
    $region19: #{tpu_custom_call.1} parent=1 // pred_check_branch
      %44 = sbr.rel (0) target = $region21
    $region20: #{tpu_custom_call.1} parent=1 // pred_region
      %46 = dma.done [#allocation5], 256
    $region21: #{tpu_custom_call.1} parent=1 // pred_fallthru
      _
    // Predicated region
    $region22: #{tpu_custom_call.1} parent=1 // pred_check
      _
    $region23: #{tpu_custom_call.1} parent=1 // pred_check_branch
      %48 = sbr.rel (0) target = $region25
    $region24: #{tpu_custom_call.1} parent=1 // pred_region
      %50 = dma.done [#allocation8], 2048
    $region25: #{tpu_custom_call.1} parent=1 // pred_fallthru
      _
    %p51 = scmp.eq.s32.totalorder 0, 0
    // Predicated region
    $region26: #{tpu_custom_call.1} parent=1 // pred_check
      %p52 = pneg %p51
    $region27: #{tpu_custom_call.1} parent=1 // pred_check_branch
      %54 = sbr.rel (%p52) target = $region29
    $region28: #{tpu_custom_call.1} parent=1 // pred_region
      %55 = vst [vmem:[#allocation2] sm:$0xff] 0.0
      %56 = vst [vmem:[#allocation2 + $0x8] sm:$0xff] 0.0
    $region29: #{tpu_custom_call.1} parent=1 // pred_fallthru
      _
    %v57 = vld [vmem:[#allocation2] sm:$0xff]
    %v58 = vld [vmem:[#allocation2 + $0x8] sm:$0xff]
    %v59 = vld [vmem:[#allocation4] sm:$0xff]
    %v60 = vld [vmem:[#allocation4 + $0x8] sm:$0xff]
    %v61 = vld [vmem:[#allocation7] sm:$0xff]
    %v62 = vld [vmem:[#allocation7 + $0x8] sm:$0xff]
    %v63 = vld [vmem:[#allocation7 + $0x10] sm:$0xff]
    %v64 = vld [vmem:[#allocation7 + $0x18] sm:$0xff]
    %v65 = vld [vmem:[#allocation7 + $0x20] sm:$0xff]
    %v66 = vld [vmem:[#allocation7 + $0x28] sm:$0xff]
    %v67 = vld [vmem:[#allocation7 + $0x30] sm:$0xff]
    %v68 = vld [vmem:[#allocation7 + $0x38] sm:$0xff]
    %v69 = vld [vmem:[#allocation7 + $0x40] sm:$0xff]
    %v70 = vld [vmem:[#allocation7 + $0x48] sm:$0xff]
    %v71 = vld [vmem:[#allocation7 + $0x50] sm:$0xff]
    %v72 = vld [vmem:[#allocation7 + $0x58] sm:$0xff]
    %v73 = vld [vmem:[#allocation7 + $0x60] sm:$0xff]
    %v74 = vld [vmem:[#allocation7 + $0x68] sm:$0xff]
    %v75 = vld [vmem:[#allocation7 + $0x70] sm:$0xff]
    %v76 = vld [vmem:[#allocation7 + $0x78] sm:$0xff]
    %77 = vmatpush.msra.mxu0 %v76
    %78 = vmatpush.msra.mxu0 %v75
    %79 = vmatpush.msra.mxu0 %v74
    %80 = vmatpush.msra.mxu0 %v73
    %81 = vmatpush.msra.mxu0 %v72
    %82 = vmatpush.msra.mxu0 %v71
    %83 = vmatpush.msra.mxu0 %v70
    %84 = vmatpush.msra.mxu0 %v69
    %85 = vmatpush.msra.mxu0 %v68
    %86 = vmatpush.msra.mxu0 %v67
    %87 = vmatpush.msra.mxu0 %v66
    %88 = vmatpush.msra.mxu0 %v65
    %89 = vmatpush.msra.mxu0 %v64
    %90 = vmatpush.msra.mxu0 %v63
    %91 = vmatpush.msra.mxu0 %v62
    %92 = vmatpush.msra.mxu0 %v61
    %93 = vmatmul.f32.gmra.mxu0 %v59
    %v94 = vpop.f32.mrf.mxu0
    %v95 = vadd.f32 0.0, %v94
    %96 = vmatmul.f32.gmra.mxu0 %v60
    %v97 = vpop.f32.mrf.mxu0
    %v98 = vadd.f32 0.0, %v97
    %99 = vdwg.mxu0
    %v100 = vadd.f32 %v57, %v95
    %v101 = vadd.f32 %v58, %v98
    %102 = vst [vmem:[#allocation2] sm:$0xff] %v100
    %103 = vst [vmem:[#allocation2 + $0x8] sm:$0xff] %v101
    // Predicated region
    $region30: #{tpu_custom_call.1} parent=1 // pred_check
      %p104 = pneg %p51
    $region31: #{tpu_custom_call.1} parent=1 // pred_check_branch
      %106 = sbr.rel (%p104) target = $region33
    $region32: #{tpu_custom_call.1} parent=1 // pred_region
      %v107 = vld [vmem:[#allocation2] sm:$0xff]
      %v108 = vld [vmem:[#allocation2 + $0x8] sm:$0xff]
      %s109 = sld [smem:[#allocation3]]
      %v110 = vstv %s109
      %v111 = vmul.f32 %v107, %v110
      %v112 = vmul.f32 %v108, %v110
      %v113 = vld [vmem:[%s2] sm:$0x1]
      %v115 = vperm.slane %v113, 0
      %v117 = vadd.f32 %v111, %v115
      %v118 = vadd.f32 %v112, %v115
      %119 = vst [vmem:[#allocation9] sm:$0xff] %v117
      %120 = vst [vmem:[#allocation9 + $0x8] sm:$0xff] %v118
    $region33: #{tpu_custom_call.1} parent=1 // pred_fallthru
      _
    // Predicated region
    $region34: #{tpu_custom_call.1} parent=1 // pred_check
      _
    $region35: #{tpu_custom_call.1} parent=1 // pred_check_branch
      %122 = sbr.rel (0) target = $region37
    $region36: #{tpu_custom_call.1} parent=1 // pred_region
      %124 = vsyncadd [#allocation6], 0
      %s125 = sshll.u32 [#allocation9], 4
      %s126 = int_to_ptr.vmem [resolvable:$true] %s125
      %s127 = sshll.u32 %s4, 4
      %s128 = int_to_ptr.hbm [resolvable:$true] %s127
      %133 = dma.vmem_to_hbm [thread:$0]  %s126, 256, %s128, [#allocation6], 128, 128, 8
    $region37: #{tpu_custom_call.1} parent=1 // pred_fallthru
      _
    // Predicated region
    $region38: #{tpu_custom_call.1} parent=1 // pred_check
      _
    $region39: #{tpu_custom_call.1} parent=1 // pred_check_branch
      %135 = sbr.rel (0) target = $region41
    $region40: #{tpu_custom_call.1} parent=1 // pred_region
      %137 = dma.done [#allocation6], 256
    $region41: #{tpu_custom_call.1} parent=1 // pred_fallthru
      _
    %138 = vsyncpa [#allocation5], 1
    %139 = vsyncpa [#allocation8], 1
    %140 = vsyncpa [#allocation6], 1

</llo_original>
